<compile_context>
chip_gen: v5e
topology: v5e:2x2
jax: 0.10.0
libtpu: 0.0.40
codegen_flags: <defaults>
</compile_context>

<pallas_src>
import jax
import jax.numpy as jnp
from jax.experimental import pallas as pl
from jax.experimental.pallas import tpu as pltpu


# ----------------------------------------------------------------------------
# Pallas kernel: fused phase-GEMM + bias + ReLU (lane-dense transposed output)
# ----------------------------------------------------------------------------
def _phase_gemm_relu_kernel(w_ref, b_ref, x_ref, o_ref):
    # w_ref: (4*Cout, K) bf16 resident   x_ref: (K, TM) bf16
    # b_ref: (4*Cout, 1) f32 resident    o_ref: (4*Cout, TM) f32  (lane-dense)
    acc = jnp.dot(w_ref[...], x_ref[...], preferred_element_type=jnp.float32)
    o_ref[...] = jnp.maximum(acc + b_ref[...], 0.0).astype(o_ref.dtype)


def _phase_gemm_relu(w_lhs, bias_col, patches, *, tm_target=512):
    """relu(w_lhs @ patches[n] + bias) per batch element, tiled over M = H*W."""
    N, K, HW = patches.shape
    crows = w_lhs.shape[0]                       # 4 * Cout
    # Tile: full extent if small, else 512 (multiple of 128 -> lane aligned;
    # also keeps the VMEM footprint well under the 32 MiB scoped default on v7x).
    tm = HW if HW <= tm_target else tm_target
    grid = (N, pl.cdiv(HW, tm))

    return pl.pallas_call(
        _phase_gemm_relu_kernel,
        out_shape=jax.ShapeDtypeStruct((N, crows, HW), jnp.float32),
        grid_spec=pltpu.PrefetchScalarGridSpec(
            num_scalar_prefetch=0,
            grid=grid,
            in_specs=[
                pl.BlockSpec((crows, K), lambda n, i: (0, 0)),      # resident W
                pl.BlockSpec((crows, 1), lambda n, i: (0, 0)),      # resident bias
                pl.BlockSpec((None, K, tm), lambda n, i: (n, 0, i)),  # streamed taps
            ],
            out_specs=pl.BlockSpec((None, crows, tm), lambda n, i: (n, 0, i)),
        ),
        compiler_params=pltpu.CompilerParams(
            dimension_semantics=("parallel", "parallel"),
        ),
    )(w_lhs, bias_col, patches)


# ----------------------------------------------------------------------------
# unetUp forward
# ----------------------------------------------------------------------------
def unet_up_forward(inputs1, inputs2, w_t, bias):
    """
    inputs1: (N, C1, 2H, 2W) f32 NCHW
    inputs2: (N, Cin, H, W)  f32 NCHW
    w_t:     (Cin, Cout, 3, 3)  PyTorch ConvTranspose2d weight layout
    bias:    (Cout,)
    returns: (N, C1 + Cout, 2H, 2W) NCHW
    """
    N, Cin, H, W = inputs2.shape
    Cout = w_t.shape[1]

    # --- phase decomposition taps (stays NCHW; bf16 stream) ------------------
    # out[2r+py, 2s+px] only depends on x[r..r+1, s..s+1]; pad one zero row/col.
    x = inputs2.astype(jnp.bfloat16)
    xp = jnp.pad(x, ((0, 0), (0, 0), (0, 1), (0, 1)))
    taps = jnp.stack(
        [xp[:, :, :H, :W],      # x[r,   s  ]
         xp[:, :, :H, 1:],      # x[r,   s+1]
         xp[:, :, 1:, :W],      # x[r+1, s  ]
         xp[:, :, 1:, 1:]],     # x[r+1, s+1]
        axis=2)                                            # (N, Cin, 4, H, W)
    patches = taps.reshape(N, Cin * 4, H * W)              # K index = c*4 + tap

    # --- combined phase weight: w_lhs[p*Cout+co, c*4+tap] --------------------
    Wf = w_t.astype(jnp.float32)
    zeros = jnp.zeros((Cin, Cout), jnp.float32)

    def wk(ky, kx):
        return Wf[:, :, ky, kx]                            # (Cin, Cout)

    # phases ordered (even,even), (even,odd), (odd,even), (odd,odd)
    phase_tap = [
        [wk(1, 1), zeros,     zeros,     zeros    ],
        [wk(1, 2), wk(1, 0),  zeros,     zeros    ],
        [wk(2, 1), zeros,     wk(0, 1),  zeros    ],
        [wk(2, 2), wk(2, 0),  wk(0, 2),  wk(0, 0)],
    ]
    w_big = jnp.stack([jnp.stack(row, axis=0) for row in phase_tap], axis=0)
    #                                                      (phase, tap, Cin, Cout)
    w_lhs = jnp.transpose(w_big, (0, 3, 2, 1)).reshape(4 * Cout, 4 * Cin)
    w_lhs = w_lhs.astype(jnp.bfloat16)
    bias_col = jnp.tile(bias.astype(jnp.float32), 4).reshape(4 * Cout, 1)

    # --- Pallas hot path ------------------------------------------------------
    out_t = _phase_gemm_relu(w_lhs, bias_col, patches)     # (N, 4*Cout, H*W) f32

    # --- interleave phases back to NCHW and concat ----------------------------
    # TODO(synk): write the conv branch straight into the concat buffer with
    # strided stores + input_output_aliases to drop this XLA transpose/concat.
    y = out_t.reshape(N, 2, 2, Cout, H, W)                 # (n, py, px, co, r, s)
    y = jnp.transpose(y, (0, 3, 4, 1, 5, 2)).reshape(N, Cout, 2 * H, 2 * W)
    return jnp.concatenate([inputs1.astype(jnp.float32), y], axis=1)


# ----------------------------------------------------------------------------
if __name__ == "__main__":
    key = jax.random.PRNGKey(0)
    k1, k2, k3, k4 = jax.random.split(key, 4)

    N, in_size, out_size = 2, 4, 4
    H = W = 16                     # inputs2 spatial; upsampled to 32x32
    C1 = 4                         # inputs1 channels

    inputs1 = jax.random.normal(k1, (N, C1, 2 * H, 2 * W), dtype=jnp.float32)
    inputs2 = jax.random.normal(k2, (N, in_size, H, W), dtype=jnp.float32)
    w_t = 0.1 * jax.random.normal(k3, (in_size, out_size, 3, 3), dtype=jnp.float32)
    bias = 0.1 * jax.random.normal(k4, (out_size,), dtype=jnp.float32)

    out = jax.jit(unet_up_forward)(inputs1, inputs2, w_t, bias)
    jax.block_until_ready(out)
    assert out.shape == (N, C1 + out_size, 2 * H, 2 * W), out.shape

    # Reference: ConvTranspose2d(k=3,s=2,p=1,out_pad=1) == correlation of the
    # zero-dilated input with the spatially-flipped kernel, padding (1, 2).
    w_ref = jnp.transpose(w_t[:, :, ::-1, ::-1], (1, 0, 2, 3))   # (Cout,Cin,3,3)
    conv = jax.lax.conv_general_dilated(
        inputs2, w_ref, window_strides=(1, 1),
        padding=((1, 2), (1, 2)), lhs_dilation=(2, 2),
        dimension_numbers=("NCHW", "OIHW", "NCHW"),
        precision=jax.lax.Precision.HIGHEST)
    ref = jnp.concatenate(
        [inputs1, jnp.maximum(conv + bias[None, :, None, None], 0.0)], axis=1)
    max_err = float(jnp.max(jnp.abs(out - ref)))
    assert jnp.allclose(out, ref, atol=5e-2, rtol=5e-2), max_err

    print("KERNEL_OK")
</pallas_src>

<mosaic_0001>
module attributes {stable_mosaic.version = 11 : i64} {
  func.func @_phase_gemm_relu_kernel(%arg0: i32, %arg1: i32, %arg2: memref<16x16xbf16, #tpu.memory_space<vmem>>, %arg3: memref<16x1xf32, #tpu.memory_space<vmem>>, %arg4: memref<1x16x256xbf16, #tpu.memory_space<vmem>>, %arg5: memref<1x16x256xf32, #tpu.memory_space<vmem>>) attributes {dimension_semantics = [#tpu.dimension_semantics<parallel>, #tpu.dimension_semantics<parallel>], iteration_bounds = array<i64: 2, 1>, scalar_prefetch = 0 : i64, scratch_operands = 0 : i64, tpu.core_type = #tpu.core_type<tc>, window_params = [{pipeline_mode = #tpu.pipeline_mode<synchronous>, transform_indices = @transform_0, window_bounds = array<i64: 16, 16>}, {pipeline_mode = #tpu.pipeline_mode<synchronous>, transform_indices = @transform_1, window_bounds = array<i64: 16, 1>}, {transform_indices = @transform_2, window_bounds = array<i64: 1, 16, 256>}, {transform_indices = @transform_3, window_bounds = array<i64: 1, 16, 256>}]} {
    %c0 = arith.constant 0 : index
    %c0_0 = arith.constant 0 : index
    %0 = vector.load %arg2[%c0, %c0_0] : memref<16x16xbf16, #tpu.memory_space<vmem>>, vector<16x16xbf16>
    %c0_1 = arith.constant 0 : index
    %c0_2 = arith.constant 0 : index
    %c0_3 = arith.constant 0 : index
    %1 = vector.load %arg4[%c0_1, %c0_2, %c0_3] : memref<1x16x256xbf16, #tpu.memory_space<vmem>>, vector<1x16x256xbf16>
    %2 = vector.shape_cast %1 : vector<1x16x256xbf16> to vector<16x256xbf16>
    %cst = arith.constant dense<0.000000e+00> : vector<16x256xf32>
    %3 = tpu.matmul %0, %2, %cst {dimension_numbers = #tpu.dot_dimension_numbers<[1], [0], [0], [1], [0, 0, 1, 1], [], []>} : vector<16x16xbf16>, vector<16x256xbf16>, vector<16x256xf32> -> vector<16x256xf32>
    %c0_4 = arith.constant 0 : index
    %c0_5 = arith.constant 0 : index
    %4 = vector.load %arg3[%c0_4, %c0_5] : memref<16x1xf32, #tpu.memory_space<vmem>>, vector<16x1xf32>
    %5 = vector.broadcast %4 : vector<16x1xf32> to vector<16x256xf32>
    %6 = arith.addf %3, %5 : vector<16x256xf32>
    %cst_6 = arith.constant 0.000000e+00 : f32
    %7 = vector.broadcast %cst_6 : f32 to vector<16x256xf32>
    %8 = arith.maximumf %6, %7 : vector<16x256xf32>
    %c0_7 = arith.constant 0 : index
    %c0_8 = arith.constant 0 : index
    %c0_9 = arith.constant 0 : index
    %9 = vector.load %arg5[%c0_7, %c0_8, %c0_9] : memref<1x16x256xf32, #tpu.memory_space<vmem>>, vector<1x16x256xf32>
    %10 = vector.shape_cast %9 : vector<1x16x256xf32> to vector<16x256xf32>
    %11 = vector.shape_cast %8 : vector<16x256xf32> to vector<1x16x256xf32>
    tpu.vector_store %arg5[%c0_7, %c0_8, %c0_9], %11 {strides = array<i32>} : memref<1x16x256xf32, #tpu.memory_space<vmem>>, vector<1x16x256xf32>,
    return
  }
  func.func @transform_0(%arg0: i32, %arg1: i32) -> (i32, i32) {
    %c0_i32 = arith.constant 0 : i32
    %c0_i32_0 = arith.constant 0 : i32
    %c0_i32_1 = arith.constant 0 : i32
    return %c0_i32, %c0_i32_0 : i32, i32
  }
  func.func @transform_1(%arg0: i32, %arg1: i32) -> (i32, i32) {
    %c0_i32 = arith.constant 0 : i32
    %c0_i32_0 = arith.constant 0 : i32
    %c0_i32_1 = arith.constant 0 : i32
    return %c0_i32, %c0_i32_0 : i32, i32
  }
  func.func @transform_2(%arg0: i32, %arg1: i32) -> (i32, i32, i32) {
    %c0_i32 = arith.constant 0 : i32
    %c0_i32_0 = arith.constant 0 : i32
    return %arg0, %c0_i32, %arg1 : i32, i32, i32
  }
  func.func @transform_3(%arg0: i32, %arg1: i32) -> (i32, i32, i32) {
    %c0_i32 = arith.constant 0 : i32
    %c0_i32_0 = arith.constant 0 : i32
    return %arg0, %c0_i32, %arg1 : i32, i32, i32
  }
}

</mosaic_0001>

<llo_original>
// kernel: tile.8
$region0: #{tile.8}
  #allocation0 [shape = 's32[1]{0}', space=sflag, size = 0x4, scoped, tag = 'scoped memory for tile.8']
  %s0 = inlined_call_operand.vmem [shape: f32[4], index: 0, kind: input, shape index: {}]
  %s1 = inlined_call_operand.vmem [shape: f32[4,4], index: 1, kind: output, shape index: {}]
  // Predicated region
  $region2: #{tile.8} parent=0 // pred_check
    _
  $region3: #{tile.8} parent=0 // pred_check_branch
    %3 = sbr.rel (0) target = $region5
  $region4: #{tile.8} parent=0 // pred_region
    _
  $region5: #{tile.8} parent=0 // pred_fallthru
    _
  %v4 = vld [vmem:[%s0] ss:$0 sm:$0xff]
  %5 = vst [vmem:[%s1] sm:$0xf] %v4

// kernel: tile.0
$region0: #{tile.0}
  %s0 = inlined_call_operand.vmem [shape: f32[4,4], index: 0, kind: input, shape index: {}]
  %s1 = inlined_call_operand.vmem [shape: f32[16,1], index: 1, kind: output, shape index: {}]
  $region1: #{tile.0} parent=0
    #allocation0 [shape = 'u8[4096]{0}', space=vmem, size = 0x1000, scoped, tag = 'scoped mem for input reshape']
    %s3 = ssub.s32 16, 1
    %v4 = vld [vmem:[%s0] sm:%s3]
    %5 = vst [vmem:[#allocation0] sm:%s3] %v4
    %v6 = vld [vmem:[#allocation0] sm:$0xf]
    %vm7 = vcmask 7168
    %8 = vst.msk [vmem:[%s1] ss:$4 sm:$0xf] %vm7, %v6
    %v9 = vld [vmem:[#allocation0] sm:$0xf]
    %10 = vrot.lane.b32.xlu0 %v9, 127
    %v11 = vpop.permute.xlu0 %10
    %vm12 = vcmask 7168
    %s13 = scalar_lea.vmem %s1, 1
    %14 = vst.msk [vmem:[%s13] ss:$4 sm:$0xf] %vm12, %v11
    %v15 = vld [vmem:[#allocation0] sm:$0xf]
    %16 = vrot.lane.b32.xlu0 %v15, 126
    %v17 = vpop.permute.xlu0 %16
    %vm18 = vcmask 7168
    %s19 = scalar_lea.vmem %s1, 2
    %20 = vst.msk [vmem:[%s19] ss:$4 sm:$0xf] %vm18, %v17
    %v21 = vld [vmem:[#allocation0] sm:$0xf]
    %22 = vrot.lane.b32.xlu0 %v21, 125
    %v23 = vpop.permute.xlu0 %22
    %vm24 = vcmask 7168
    %s25 = scalar_lea.vmem %s1, 3
    %26 = vst.msk [vmem:[%s25] ss:$4 sm:$0xf] %vm24, %v23

// kernel: unet_up_forward.1
$region0: #{unet_up_forward.1}
  #allocation0 [shape = 'u32[]', space=smem, size = 0x4, offset = 0x4, fixed_abs, tag = 'smem constant byte address 0x4 - core index']
  #allocation1 [shape = 'u32[72,128]{1,0:T(1,128)}', space=vmem, size = 0x9000, scoped, tag = 'internal scratch']
  %s0 = inlined_call_operand.vmem [shape: bf16[16,16], index: 0, kind: input, shape index: {}]
  %s1 = inlined_call_operand.vmem [shape: f32[16,1], index: 1, kind: input, shape index: {}]
  %s2 = inlined_call_operand.vmem [shape: bf16[2,16,256], index: 2, kind: input, shape index: {}]
  %s3 = inlined_call_operand.vmem [shape: f32[2,16,256], index: 3, kind: output, shape index: {}]
  %s4 = sld [smem:[#allocation0]]
  $region45: #{unet_up_forward.1} parent=0
    _
  %s6 = ssub.s32 1, %s4
  %s7 = scalar_select 0, %s6, %s4
  loop: start=0, step=1, limit=4
  $region2: #{unet_up_forward.1} parent=0 // loop_pre_header
    _
  $region3: #{unet_up_forward.1} parent=0 // loop_header
    %s9 = sphi 0, %s13
    %p10 = scmp.ge.s32.totalorder %s9, 4
    %s16 = sphi 0, %s28
    %s17 = sphi 0, %s24
    %s18 = sphi 0, %s16
    %s19 = sphi 0, %s17
    %s20 = sphi 0, %s18
    %s21 = sphi 0, %s19
    %s29 = sphi 0, %s29
    %s31 = sphi 0, %s29
    %s32 = sphi 0, %s31
    %s46 = sphi 0, %s32
    %s50 = sphi 0, %s50
    %s52 = sphi 0, %s50
    %s53 = sphi 0, %s52
    %s67 = sphi 0, %s53
    %s75 = sphi 0, %s77
    %s78 = sphi 0, %s75
    %s79 = sphi 0, %s78
    %s95 = sphi 0, %s79
    %s103 = sphi 0, %s105
    %s106 = sphi 0, %s103
    %s107 = sphi 0, %s106
    %s123 = sphi 0, %s107
  $region4: #{unet_up_forward.1} parent=0 // loop_header_branch
    %12 = sbr.rel (%p10) target = $region8
  $region5: #{unet_up_forward.1} parent=0 // loop_body
    %s14 = ssub.s32 %s9, 1
    %s15 = ssub.s32 %s9, 2
    %s22 = sadd.s32 1, %s17
    %p23 = scmp.ge.s32.totalorder %s22, 1
    %s24 = scalar_select %p23, 0, %s22
    %s25 = sadd.s32 1, %s16
    %s26 = scalar_select %p23, %s25, %s16
    %p27 = scmp.ge.s32.totalorder %s26, 2
    %s28 = scalar_select %p27, 0, %s26
    %s30 = sadd.s32 %s29, 1
    %p33 = scmp.eq.s32.totalorder %s9, 1
    %p34 = scmp.ne.s32.totalorder %s29, %s31
    %p35 = scmp.eq.s32.totalorder %s9, 0
    %p36 = por %p34, %p35
    %p37 = scmp.ne.s32.totalorder %s29, %s31
    %p38 = scmp.eq.s32.totalorder %s14, 1
    %p39 = por %p37, %p38
    %p40 = scmp.ne.s32.totalorder %s31, %s32
    %p41 = scmp.eq.s32.totalorder %s14, 0
    %p42 = por %p40, %p41
    %p43 = scmp.ne.s32.totalorder %s31, %s32
    %p44 = scmp.eq.s32.totalorder %s15, 1
    %p45 = por %p43, %p44
    %p47 = scmp.ne.s32.totalorder %s32, %s46
    %p48 = scmp.eq.s32.totalorder %s15, 0
    %p49 = por %p47, %p48
    %s51 = sadd.s32 %s50, 1
    %p54 = scmp.eq.s32.totalorder %s9, 1
    %p55 = scmp.ne.s32.totalorder %s50, %s52
    %p56 = scmp.eq.s32.totalorder %s9, 0
    %p57 = por %p55, %p56
    %p58 = scmp.ne.s32.totalorder %s50, %s52
    %p59 = scmp.eq.s32.totalorder %s14, 1
    %p60 = por %p58, %p59
    %p61 = scmp.ne.s32.totalorder %s52, %s53
    %p62 = scmp.eq.s32.totalorder %s14, 0
    %p63 = por %p61, %p62
    %p64 = scmp.ne.s32.totalorder %s52, %s53
    %p65 = scmp.eq.s32.totalorder %s15, 1
    %p66 = por %p64, %p65
    %p68 = scmp.ne.s32.totalorder %s53, %s67
    %p69 = scmp.eq.s32.totalorder %s15, 0
    %p70 = por %p68, %p69
    %s71 = ssub.s32 %s16, %s28
    %s72 = ssub.s32 %s17, %s24
    %s73 = sor.u32 %s71, %s72
    %p74 = scmp.eq.s32.totalorder %s73, 0
    %s76 = sadd.s32 %s75, 1
    %s77 = scalar_select %p74, %s75, %s76
    %p80 = pneg %p74
    %p81 = scmp.eq.s32.totalorder %s9, 1
    %p82 = por %p80, %p81
    %p83 = scmp.ne.s32.totalorder %s75, %s78
    %p84 = scmp.eq.s32.totalorder %s9, 0
    %p85 = por %p83, %p84
    %p86 = scmp.ne.s32.totalorder %s75, %s78
    %p87 = scmp.eq.s32.totalorder %s14, 1
    %p88 = por %p86, %p87
    %p89 = scmp.ne.s32.totalorder %s78, %s79
    %p90 = scmp.eq.s32.totalorder %s14, 0
    %p91 = por %p89, %p90
    %p92 = scmp.ne.s32.totalorder %s78, %s79
    %p93 = scmp.eq.s32.totalorder %s15, 1
    %p94 = por %p92, %p93
    %p96 = scmp.ne.s32.totalorder %s79, %s95
    %p97 = scmp.eq.s32.totalorder %s15, 0
    %p98 = por %p96, %p97
    %s99 = ssub.s32 %s16, %s28
    %s100 = ssub.s32 %s17, %s24
    %s101 = sor.u32 %s99, %s100
    %p102 = scmp.eq.s32.totalorder %s101, 0
    %s104 = sadd.s32 %s103, 1
    %s105 = scalar_select %p102, %s103, %s104
    %p108 = pneg %p102
    %p109 = scmp.eq.s32.totalorder %s9, 1
    %p110 = por %p108, %p109
    %p111 = scmp.ne.s32.totalorder %s103, %s106
    %p112 = scmp.eq.s32.totalorder %s9, 0
    %p113 = por %p111, %p112
    %p114 = scmp.ne.s32.totalorder %s103, %s106
    %p115 = scmp.eq.s32.totalorder %s14, 1
    %p116 = por %p114, %p115
    %p117 = scmp.ne.s32.totalorder %s106, %s107
    %p118 = scmp.eq.s32.totalorder %s14, 0
    %p119 = por %p117, %p118
    %p120 = scmp.ne.s32.totalorder %s106, %s107
    %p121 = scmp.eq.s32.totalorder %s15, 1
    %p122 = por %p120, %p121
    %p124 = scmp.ne.s32.totalorder %s107, %s123
    %p125 = scmp.eq.s32.totalorder %s15, 0
    %p126 = por %p124, %p125
    %p127 = scmp.le.s32.totalorder 1, %s9
    %p128 = scmp.lt.s32.totalorder %s9, 3
    %p129 = pnand %p127, %p128
    %p130 = pneg %p129
    // Predicated region
    $region9: #{unet_up_forward.1} parent=5 // pred_check
      _
    $region10: #{unet_up_forward.1} parent=5 // pred_check_branch
      %132 = sbr.rel (%p129) target = $region12
    $region11: #{unet_up_forward.1} parent=5 // pred_region
      %s133 = ssub.s32 %s9, 1
      // Predicated region
      $region13: #{unet_up_forward.1} parent=11 // pred_check
        %p134 = pneg %p42
      $region14: #{unet_up_forward.1} parent=11 // pred_check_branch
        %136 = sbr.rel (%p134) target = $region16
      $region15: #{unet_up_forward.1} parent=11 // pred_region
        _
      $region16: #{unet_up_forward.1} parent=11 // pred_fallthru
        _
      // Predicated region
      $region17: #{unet_up_forward.1} parent=11 // pred_check
        %p137 = pneg %p63
      $region18: #{unet_up_forward.1} parent=11 // pred_check_branch
        %139 = sbr.rel (%p137) target = $region20
      $region19: #{unet_up_forward.1} parent=11 // pred_region
        _
      $region20: #{unet_up_forward.1} parent=11 // pred_fallthru
        _
    $region12: #{unet_up_forward.1} parent=5 // pred_fallthru
      _
    %p140 = scmp.lt.s32.totalorder %s9, 2
    // Predicated region
    $region21: #{unet_up_forward.1} parent=5 // pred_check
      %p141 = pneg %p140
    $region22: #{unet_up_forward.1} parent=5 // pred_check_branch
      %143 = sbr.rel (%p141) target = $region24
    $region23: #{unet_up_forward.1} parent=5 // pred_region
      // Predicated region
      $region25: #{unet_up_forward.1} parent=23 // pred_check
        %p144 = pneg %p85
      $region26: #{unet_up_forward.1} parent=23 // pred_check_branch
        %146 = sbr.rel (%p144) target = $region28
      $region27: #{unet_up_forward.1} parent=23 // pred_region
        %s147 = smul.u32 2, %s17
        %p148 = scmp.lt.s32.totalorder %s16, 1
        %s149 = scalar_select %p148, %s16, 1
        %p150 = scmp.lt.s32.totalorder %s147, 1
        %s151 = scalar_select %p150, %s147, 1
        %s152 = smul.addr %s149, 4
        %s153 = sadd.s32 %s151, %s152
        %s154 = smul.addr %s153, 4
        %s155 = scalar_lea.vmem %s2, %s154
        %s156 = smul.u32 2, %s17
      $region28: #{unet_up_forward.1} parent=23 // pred_fallthru
        _
    $region24: #{unet_up_forward.1} parent=5 // pred_fallthru
      _
    %p157 = scmp.le.s32.totalorder 1, %s9
    %p158 = scmp.lt.s32.totalorder %s9, 3
    %p159 = pnand %p157, %p158
    %p160 = pneg %p159
    // Predicated region
    $region29: #{unet_up_forward.1} parent=5 // pred_check
      _
    $region30: #{unet_up_forward.1} parent=5 // pred_check_branch
      %162 = sbr.rel (%p159) target = $region32
    $region31: #{unet_up_forward.1} parent=5 // pred_region
      %s163 = ssub.s32 %s9, 1
      %p164 = pneg %p42
      %p165 = pneg %p39
      %p166 = pneg %p63
      %p167 = pneg %p60
      %s168 = smul.u32 2, %s19
      %p169 = scmp.lt.s32.totalorder %s18, 1
      %s170 = scalar_select %p169, %s18, 1
      %p171 = scmp.lt.s32.totalorder %s168, 1
      %s172 = scalar_select %p171, %s168, 1
      %s173 = smul.addr %s170, 4
      %s174 = sadd.s32 %s172, %s173
      %s175 = smul.addr %s174, 4
      %s176 = scalar_lea.vmem %s2, %s175
      %p177 = pneg %p91
      %p178 = pneg %p88
      %p179 = pneg %p119
      %p180 = pneg %p116
      %s181 = smul.u32 2, %s19
      %p182 = scmp.lt.s32.totalorder %s18, 1
      %s183 = scalar_select %p182, %s18, 1
      %p184 = scmp.lt.s32.totalorder %s181, 1
      %s185 = scalar_select %p184, %s181, 1
      %s186 = smul.addr %s183, 4
      %s187 = sadd.s32 %s185, %s186
      %s188 = smul.addr %s187, 8
      %s189 = scalar_lea.vmem %s3, %s188
      %s190 = smul.u32 2, %s19
      %p191 = scmp.lt.s32.totalorder %s18, 1
      %s192 = scalar_select %p191, %s18, 1
      %p193 = scmp.lt.s32.totalorder %s190, 1
      %s194 = scalar_select %p193, %s190, 1
      %s195 = smul.addr %s192, 4
      %s196 = sadd.s32 %s194, %s195
      %s197 = smul.addr %s196, 4
      %s198 = scalar_lea.vmem %s2, %s197
      %s199 = smul.u32 2, %s19
      %s200 = smul.u32 2, %s19
      %p201 = scmp.lt.s32.totalorder %s18, 1
      %s202 = scalar_select %p201, %s18, 1
      %p203 = scmp.lt.s32.totalorder %s200, 1
      %s204 = scalar_select %p203, %s200, 1
      %s205 = smul.addr %s202, 4
      %s206 = sadd.s32 %s204, %s205
      %s207 = smul.addr %s206, 8
      %s208 = scalar_lea.vmem %s3, %s207
      %s209 = smul.u32 2, %s19
      %v211 = vld [vmem:[%s0] sm:$0xf]
      %v212 = vld [vmem:[%s0 + $0x4] sm:$0xf]
      %v213 = vld [vmem:[%s198] sm:$0xff]
      %v214 = vld [vmem:[%s198 + $0x8] sm:$0xff]
      %v215 = vld [vmem:[%s1] sm:$0xff]
      %v216 = vld [vmem:[%s1 + $0x8] sm:$0xff]
      %218 = vset.pattern.permute.xlu0 0
      %219 = vperm.xlu0 %218, %v215
      %v220 = vpop.permute.xlu0 %219
      %223 = vset.pattern.permute.xlu0 0
      %224 = vperm.xlu0 %223, %v216
      %v225 = vpop.permute.xlu0 %224
      %v229 = vunpack.c.l.b16 %v211
      %v230 = vunpack.c.l.b16 %v212
      %v231 = vpack.c.b16 %v230, %v229
      %v234 = vunpack.c.l.b16 %v213
      %v235 = vunpack.c.h.b16 %v213
      %v236 = vunpack.c.l.b16 %v214
      %v237 = vunpack.c.h.b16 %v214
      %v238 = vpack.c.b16 %v236, %v234
      %v239 = vpack.c.b16 %v237, %v235
      %vm242 = vcmask 130048
      %v244 = vsel %vm242, %v231, 0
      %246 = vmatpush.bf16.msra.mxu0 0
      %247 = vmatpush.bf16.msra.mxu0 0
      %248 = vmatpush.bf16.msra.mxu0 0
      %249 = vmatpush.bf16.msra.mxu0 0
      %250 = vmatpush.bf16.msra.mxu0 0
      %251 = vmatpush.bf16.msra.mxu0 0
      %252 = vmatpush.bf16.msra.mxu0 0
      %253 = vmatpush.bf16.msra.mxu0 %v238
      %254 = vmatmul.bf16.gmra.mxu0 %v244
      %v255 = vpop.f32.mrf.mxu0
      %v256 = vadd.f32 %v220, %v255
      %v257 = vpop.f32.mrf.mxu0
      %v258 = vadd.f32 %v225, %v257
      %259 = vdwg.mxu0
      %260 = vmatpush.bf16.msra.mxu0 0
      %261 = vmatpush.bf16.msra.mxu0 0
      %262 = vmatpush.bf16.msra.mxu0 0
      %263 = vmatpush.bf16.msra.mxu0 0
      %264 = vmatpush.bf16.msra.mxu0 0
      %265 = vmatpush.bf16.msra.mxu0 0
      %266 = vmatpush.bf16.msra.mxu0 0
      %267 = vmatpush.bf16.msra.mxu0 %v239
      %268 = vmatmul.bf16.gmra.mxu0 %v244
      %v269 = vpop.f32.mrf.mxu0
      %v270 = vadd.f32 %v220, %v269
      %v271 = vpop.f32.mrf.mxu0
      %v272 = vadd.f32 %v225, %v271
      %273 = vdwg.mxu0
      %v274 = vmax.f32 %v256, 0.0
      %v275 = vmax.f32 %v270, 0.0
      %v276 = vmax.f32 %v258, 0.0
      %v277 = vmax.f32 %v272, 0.0
      %278 = vst [vmem:[%s208] sm:$0xff] %v274
      %279 = vst [vmem:[%s208 + $0x8] sm:$0xff] %v275
      %280 = vst [vmem:[%s208 + $0x10] sm:$0xff] %v276
      %281 = vst [vmem:[%s208 + $0x18] sm:$0xff] %v277
      %s282 = smul.u32 2, %s19
      %p283 = scmp.lt.s32.totalorder %s18, 1
      %s284 = scalar_select %p283, %s18, 1
      %p285 = scmp.lt.s32.totalorder %s282, 1
      %s286 = scalar_select %p285, %s282, 1
      %s287 = smul.addr %s284, 4
      %s288 = sadd.s32 %s286, %s287
      %s289 = smul.addr %s288, 8
      %s290 = scalar_lea.vmem %s3, %s289
      // Predicated region
      $region33: #{unet_up_forward.1} parent=31 // pred_check
        %p291 = pneg %p116
      $region34: #{unet_up_forward.1} parent=31 // pred_check_branch
        %293 = sbr.rel (%p291) target = $region36
      $region35: #{unet_up_forward.1} parent=31 // pred_region
        %s294 = smul.u32 2, %s19
      $region36: #{unet_up_forward.1} parent=31 // pred_fallthru
        _
    $region32: #{unet_up_forward.1} parent=5 // pred_fallthru
      _
    %p295 = scmp.le.s32.totalorder 2, %s9
    // Predicated region
    $region37: #{unet_up_forward.1} parent=5 // pred_check
      %p296 = pneg %p295
    $region38: #{unet_up_forward.1} parent=5 // pred_check_branch
      %298 = sbr.rel (%p296) target = $region40
    $region39: #{unet_up_forward.1} parent=5 // pred_region
      %s299 = ssub.s32 %s9, 2
      // Predicated region
      $region41: #{unet_up_forward.1} parent=39 // pred_check
        %p300 = pneg %p122
      $region42: #{unet_up_forward.1} parent=39 // pred_check_branch
        %302 = sbr.rel (%p300) target = $region44
      $region43: #{unet_up_forward.1} parent=39 // pred_region
        %s303 = smul.u32 2, %s21
        %p304 = scmp.lt.s32.totalorder %s20, 1
        %s305 = scalar_select %p304, %s20, 1
        %p306 = scmp.lt.s32.totalorder %s303, 1
        %s307 = scalar_select %p306, %s303, 1
        %s308 = smul.addr %s305, 4
        %s309 = sadd.s32 %s307, %s308
        %s310 = smul.addr %s309, 8
        %s311 = scalar_lea.vmem %s3, %s310
      $region44: #{unet_up_forward.1} parent=39 // pred_fallthru
        _
    $region40: #{unet_up_forward.1} parent=5 // pred_fallthru
      _
  $region6: #{unet_up_forward.1} parent=0 // loop_footer
    %s13 = sadd.s32 1, %s9
  $region7: #{unet_up_forward.1} parent=0 // loop_footer_branch
    %8 = sbr.rel target = $region3
  $region8: #{unet_up_forward.1} parent=0 // loop_exit
    _

</llo_original>
